<compile_context>
chip_gen: v5e
topology: v5e:2x2
jax: 0.10.0
libtpu: 0.0.40
codegen_flags: <defaults>
</compile_context>

<pallas_src>
import jax
import jax.numpy as jnp
from jax.experimental import pallas as pl
from jax.experimental.pallas import tpu as pltpu


def _round_up(x, m):
    return ((x + m - 1) // m) * m


def _value_net_kernel(x_ref, w1_ref, b1_ref, w2_ref, b2_ref, w3r_ref, b3_ref,
                      out_ref):
    # fc1 + relu  (MXU, f32 accumulation)
    h1 = jnp.dot(x_ref[...], w1_ref[...], preferred_element_type=jnp.float32)
    h1 = jnp.maximum(h1 + b1_ref[...], 0.0)
    # fc2 + relu  (MXU, f32 accumulation)
    h2 = jnp.dot(h1.astype(w2_ref.dtype), w2_ref[...],
                 preferred_element_type=jnp.float32)
    h2 = jnp.maximum(h2 + b2_ref[...], 0.0)
    # Value head (out_features == 1): VPU multiply + lane reduction instead of
    # an N=1 MXU matmul (which would use 1/256 of the MXU columns).
    w3_row = w3r_ref[...].astype(jnp.float32)           # [1, fc2]
    v = jnp.sum(h2 * w3_row, axis=-1, keepdims=True)    # [tile_b, 1]
    out_ref[...] = (v + b3_ref[...]).astype(out_ref.dtype)


def value_network_forward(state, params, *, tile_b=1024,
                          compute_dtype=jnp.float32):
    """state: [B, input_dim] float32.  Returns v: [B, 1] float32.

    compute_dtype=jnp.bfloat16 runs the matmul operands in bf16 (f32 accum),
    which is MXU-native on v6e/v7x; default f32 matches PyTorch numerics.
    """
    w1, b1, w2, b2, w3, b3 = params
    B, in_dim = state.shape
    fc1 = w1.shape[1]
    fc2 = w2.shape[1]

    # Value-head weight as a lane-dense row [1, fc2].
    w3_row = w3.reshape(1, fc2)

    # Optional bf16 cast of MXU operands (biases / accumulators stay f32).
    if compute_dtype != jnp.float32:
        state_c = state.astype(compute_dtype)
        w1c = w1.astype(compute_dtype)
        w2c = w2.astype(compute_dtype)
        w3c = w3_row.astype(compute_dtype)
    else:
        state_c, w1c, w2c, w3c = state, w1, w2, w3_row

    # Batch tile: multiple of 128 (MXU row height), shrink for tiny batches,
    # pad the batch so the grid divides evenly (padded rows are sliced off).
    tile_b = max(128, min(tile_b, _round_up(B, 128)))
    b_pad = _round_up(B, tile_b)
    if b_pad != B:
        state_c = jnp.pad(state_c, ((0, b_pad - B), (0, 0)))
    grid = (b_pad // tile_b,)

    # VMEM budget: resident weights + double-buffered state/out tiles + f32
    # intermediates, plus headroom.  Comfortably inside v7x's 64 MiB for the
    # default tile_b=1024 (~3 MiB total).
    itemsize = jnp.dtype(compute_dtype).itemsize
    weight_bytes = ((w1c.size + w2c.size + w3c.size) * itemsize
                    + (b1.size + b2.size + b3.size) * 4)
    act_bytes = tile_b * (2 * in_dim * itemsize      # double-buffered input
                          + (fc1 + fc2) * 4          # h1 / h2 intermediates
                          + 2 * 1 * 4)               # double-buffered output
    vmem_limit = int(weight_bytes + act_bytes) + (8 << 20)

    cost = pl.CostEstimate(
        flops=2 * b_pad * (in_dim * fc1 + fc1 * fc2 + fc2),
        transcendentals=0,
        bytes_accessed=int(state_c.size * state_c.dtype.itemsize
                           + weight_bytes + b_pad * 4),
    )

    in_specs = [
        pl.BlockSpec((tile_b, in_dim), lambda i: (i, 0)),   # state tile
        pl.BlockSpec((in_dim, fc1),    lambda i: (0, 0)),   # W1 (resident)
        pl.BlockSpec((1, fc1),         lambda i: (0, 0)),   # b1
        pl.BlockSpec((fc1, fc2),       lambda i: (0, 0)),   # W2
        pl.BlockSpec((1, fc2),         lambda i: (0, 0)),   # b2
        pl.BlockSpec((1, fc2),         lambda i: (0, 0)),   # w3 row
        pl.BlockSpec((1, 1),           lambda i: (0, 0)),   # b3
    ]
    out_specs = pl.BlockSpec((tile_b, 1), lambda i: (i, 0))

    out = pl.pallas_call(
        _value_net_kernel,
        out_shape=jax.ShapeDtypeStruct((b_pad, 1), jnp.float32),
        grid=grid,
        in_specs=in_specs,
        out_specs=out_specs,
        compiler_params=pltpu.CompilerParams(
            dimension_semantics=("parallel",),
            vmem_limit_bytes=vmem_limit,
        ),
        cost_estimate=cost,
    )(state_c, w1c, b1, w2c, b2, w3c, b3)

    return out[:B]


def init_value_network_params(key, input_dim, fc1_dims=256, fc2_dims=256):
    """PyTorch-Linear-style init: U(-1/sqrt(fan_in), 1/sqrt(fan_in)).

    Weights are stored as [in, out] (transpose of nn.Linear's [out, in])."""
    k1, k2, k3, k4, k5, k6 = jax.random.split(key, 6)

    def unif(k, shape, fan_in):
        bound = 1.0 / jnp.sqrt(jnp.float32(fan_in))
        return jax.random.uniform(k, shape, jnp.float32, -bound, bound)

    w1 = unif(k1, (input_dim, fc1_dims), input_dim)
    b1 = unif(k2, (1, fc1_dims), input_dim)
    w2 = unif(k3, (fc1_dims, fc2_dims), fc1_dims)
    b2 = unif(k4, (1, fc2_dims), fc1_dims)
    w3 = unif(k5, (fc2_dims, 1), fc2_dims)
    b3 = unif(k6, (1, 1), fc2_dims)
    return (w1, b1, w2, b2, w3, b3)


def value_network_ref(state, params):
    """Pure-JAX reference for correctness check."""
    w1, b1, w2, b2, w3, b3 = params
    h1 = jnp.maximum(state @ w1 + b1, 0.0)
    h2 = jnp.maximum(h1 @ w2 + b2, 0.0)
    return h2 @ w3 + b3


if __name__ == "__main__":
    key = jax.random.PRNGKey(0)
    pkey, xkey, xkey2 = jax.random.split(key, 3)

    input_dim = 32          # input_dims=(32,)
    fc1_dims = fc2_dims = 256
    params = init_value_network_params(pkey, input_dim, fc1_dims, fc2_dims)

    # Small spec-shaped case (batch=8).
    batch = 8
    state = jax.random.normal(xkey, (batch, input_dim), dtype=jnp.float32)
    v = jax.block_until_ready(value_network_forward(state, params))
    v_ref = value_network_ref(state, params)
    assert v.shape == (batch, 1)
    assert jnp.allclose(v, v_ref, atol=1e-4, rtol=1e-4)

    # Larger batch: exercises the multi-step batch grid + padding path.
    batch2 = 2048 + 64      # deliberately not a multiple of TILE_B
    state2 = jax.random.normal(xkey2, (batch2, input_dim), dtype=jnp.float32)
    v2 = jax.block_until_ready(value_network_forward(state2, params))
    v2_ref = value_network_ref(state2, params)
    assert v2.shape == (batch2, 1)
    assert jnp.allclose(v2, v2_ref, atol=1e-4, rtol=1e-4)

    print("KERNEL_OK")
</pallas_src>

<mosaic_0001>
module attributes {stable_mosaic.version = 11 : i64} {
  func.func @_value_net_kernel(%arg0: i32, %arg1: memref<128x32xf32, #tpu.memory_space<vmem>>, %arg2: memref<32x256xf32, #tpu.memory_space<vmem>>, %arg3: memref<1x256xf32, #tpu.memory_space<vmem>>, %arg4: memref<256x256xf32, #tpu.memory_space<vmem>>, %arg5: memref<1x256xf32, #tpu.memory_space<vmem>>, %arg6: memref<1x256xf32, #tpu.memory_space<vmem>>, %arg7: memref<1x1xf32, #tpu.memory_space<vmem>>, %arg8: memref<128x1xf32, #tpu.memory_space<vmem>>) attributes {dimension_semantics = [#tpu.dimension_semantics<parallel>], iteration_bounds = array<i64: 1>, scalar_prefetch = 0 : i64, scratch_operands = 0 : i64, tpu.core_type = #tpu.core_type<tc>, window_params = [{transform_indices = @transform_0, window_bounds = array<i64: 128, 32>}, {pipeline_mode = #tpu.pipeline_mode<synchronous>, transform_indices = @transform_1, window_bounds = array<i64: 32, 256>}, {pipeline_mode = #tpu.pipeline_mode<synchronous>, transform_indices = @transform_2, window_bounds = array<i64: 1, 256>}, {pipeline_mode = #tpu.pipeline_mode<synchronous>, transform_indices = @transform_3, window_bounds = array<i64: 256, 256>}, {pipeline_mode = #tpu.pipeline_mode<synchronous>, transform_indices = @transform_4, window_bounds = array<i64: 1, 256>}, {pipeline_mode = #tpu.pipeline_mode<synchronous>, transform_indices = @transform_5, window_bounds = array<i64: 1, 256>}, {pipeline_mode = #tpu.pipeline_mode<synchronous>, transform_indices = @transform_6, window_bounds = array<i64: 1, 1>}, {transform_indices = @transform_7, window_bounds = array<i64: 128, 1>}]} {
    %c0 = arith.constant 0 : index
    %c0_0 = arith.constant 0 : index
    %0 = vector.load %arg1[%c0, %c0_0] : memref<128x32xf32, #tpu.memory_space<vmem>>, vector<128x32xf32>
    %c0_1 = arith.constant 0 : index
    %c0_2 = arith.constant 0 : index
    %1 = vector.load %arg2[%c0_1, %c0_2] : memref<32x256xf32, #tpu.memory_space<vmem>>, vector<32x256xf32>
    %cst = arith.constant dense<0.000000e+00> : vector<128x256xf32>
    %2 = tpu.matmul %0, %1, %cst {dimension_numbers = #tpu.dot_dimension_numbers<[1], [0], [0], [1], [0, 0, 1, 1], [], []>} : vector<128x32xf32>, vector<32x256xf32>, vector<128x256xf32> -> vector<128x256xf32>
    %c0_3 = arith.constant 0 : index
    %c0_4 = arith.constant 0 : index
    %3 = vector.load %arg3[%c0_3, %c0_4] : memref<1x256xf32, #tpu.memory_space<vmem>>, vector<1x256xf32>
    %4 = vector.broadcast %3 : vector<1x256xf32> to vector<128x256xf32>
    %5 = arith.addf %2, %4 : vector<128x256xf32>
    %cst_5 = arith.constant 0.000000e+00 : f32
    %6 = vector.broadcast %cst_5 : f32 to vector<128x256xf32>
    %7 = arith.maximumf %5, %6 : vector<128x256xf32>
    %c0_6 = arith.constant 0 : index
    %c0_7 = arith.constant 0 : index
    %8 = vector.load %arg4[%c0_6, %c0_7] : memref<256x256xf32, #tpu.memory_space<vmem>>, vector<256x256xf32>
    %cst_8 = arith.constant dense<0.000000e+00> : vector<128x256xf32>
    %9 = tpu.matmul %7, %8, %cst_8 {dimension_numbers = #tpu.dot_dimension_numbers<[1], [0], [0], [1], [0, 0, 1, 1], [], []>} : vector<128x256xf32>, vector<256x256xf32>, vector<128x256xf32> -> vector<128x256xf32>
    %c0_9 = arith.constant 0 : index
    %c0_10 = arith.constant 0 : index
    %10 = vector.load %arg5[%c0_9, %c0_10] : memref<1x256xf32, #tpu.memory_space<vmem>>, vector<1x256xf32>
    %11 = vector.broadcast %10 : vector<1x256xf32> to vector<128x256xf32>
    %12 = arith.addf %9, %11 : vector<128x256xf32>
    %cst_11 = arith.constant 0.000000e+00 : f32
    %13 = vector.broadcast %cst_11 : f32 to vector<128x256xf32>
    %14 = arith.maximumf %12, %13 : vector<128x256xf32>
    %c0_12 = arith.constant 0 : index
    %c0_13 = arith.constant 0 : index
    %15 = vector.load %arg6[%c0_12, %c0_13] : memref<1x256xf32, #tpu.memory_space<vmem>>, vector<1x256xf32>
    %16 = vector.broadcast %15 : vector<1x256xf32> to vector<128x256xf32>
    %17 = arith.mulf %14, %16 : vector<128x256xf32>
    %cst_14 = arith.constant dense<0.000000e+00> : vector<128xf32>
    %18 = vector.multi_reduction <add>, %17, %cst_14 [1] : vector<128x256xf32> to vector<128xf32>
    %19 = vector.shape_cast %18 : vector<128xf32> to vector<128x1xf32>
    %c0_15 = arith.constant 0 : index
    %c0_16 = arith.constant 0 : index
    %20 = vector.load %arg7[%c0_15, %c0_16] : memref<1x1xf32, #tpu.memory_space<vmem>>, vector<1x1xf32>
    %21 = vector.broadcast %20 : vector<1x1xf32> to vector<128x1xf32>
    %22 = arith.addf %19, %21 : vector<128x1xf32>
    %c0_17 = arith.constant 0 : index
    %c0_18 = arith.constant 0 : index
    %23 = vector.load %arg8[%c0_17, %c0_18] : memref<128x1xf32, #tpu.memory_space<vmem>>, vector<128x1xf32>
    tpu.vector_store %arg8[%c0_17, %c0_18], %22 {strides = array<i32>} : memref<128x1xf32, #tpu.memory_space<vmem>>, vector<128x1xf32>,
    return
  }
  func.func @transform_0(%arg0: i32) -> (i32, i32) {
    %c0_i32 = arith.constant 0 : i32
    %c0_i32_0 = arith.constant 0 : i32
    return %arg0, %c0_i32 : i32, i32
  }
  func.func @transform_1(%arg0: i32) -> (i32, i32) {
    %c0_i32 = arith.constant 0 : i32
    %c0_i32_0 = arith.constant 0 : i32
    %c0_i32_1 = arith.constant 0 : i32
    return %c0_i32, %c0_i32_0 : i32, i32
  }
  func.func @transform_2(%arg0: i32) -> (i32, i32) {
    %c0_i32 = arith.constant 0 : i32
    %c0_i32_0 = arith.constant 0 : i32
    %c0_i32_1 = arith.constant 0 : i32
    return %c0_i32, %c0_i32_0 : i32, i32
  }
  func.func @transform_3(%arg0: i32) -> (i32, i32) {
    %c0_i32 = arith.constant 0 : i32
    %c0_i32_0 = arith.constant 0 : i32
    %c0_i32_1 = arith.constant 0 : i32
    return %c0_i32, %c0_i32_0 : i32, i32
  }
  func.func @transform_4(%arg0: i32) -> (i32, i32) {
    %c0_i32 = arith.constant 0 : i32
    %c0_i32_0 = arith.constant 0 : i32
    %c0_i32_1 = arith.constant 0 : i32
    return %c0_i32, %c0_i32_0 : i32, i32
  }
  func.func @transform_5(%arg0: i32) -> (i32, i32) {
    %c0_i32 = arith.constant 0 : i32
    %c0_i32_0 = arith.constant 0 : i32
    %c0_i32_1 = arith.constant 0 : i32
    return %c0_i32, %c0_i32_0 : i32, i32
  }
  func.func @transform_6(%arg0: i32) -> (i32, i32) {
    %c0_i32 = arith.constant 0 : i32
    %c0_i32_0 = arith.constant 0 : i32
    %c0_i32_1 = arith.constant 0 : i32
    return %c0_i32, %c0_i32_0 : i32, i32
  }
  func.func @transform_7(%arg0: i32) -> (i32, i32) {
    %c0_i32 = arith.constant 0 : i32
    %c0_i32_0 = arith.constant 0 : i32
    return %arg0, %c0_i32 : i32, i32
  }
}

</mosaic_0001>

<llo_original>
// kernel: tpu_custom_call.1
$region0: #{tpu_custom_call.1}
  #allocation0 [shape = 'u32[]', space=smem, size = 0x4, offset = 0x4, fixed_abs, tag = 'smem constant byte address 0x4 - core index']
  #allocation1 [shape = 'u32[72,128]{1,0:T(1,128)}', space=vmem, size = 0x9000, scoped, tag = 'internal scratch']
  #allocation2 [shape = 'f32[1,1]{1,0:T(1,128)S(1)}', space=vmem, size = 0x200, scoped, tag = 'scoped memory for tpu_custom_call.1']
  %s0 = inlined_call_operand.vmem [shape: f32[128,32], index: 0, kind: input, shape index: {}]
  %s1 = inlined_call_operand.vmem [shape: f32[32,256], index: 1, kind: input, shape index: {}]
  %s2 = inlined_call_operand.vmem [shape: f32[1,256], index: 2, kind: input, shape index: {}]
  %s3 = inlined_call_operand.hbm [shape: f32[256,256], index: 3, kind: input, shape index: {}]
  %s4 = inlined_call_operand.vmem [shape: f32[1,256], index: 4, kind: input, shape index: {}]
  %s5 = inlined_call_operand.vmem [shape: f32[1,256], index: 5, kind: input, shape index: {}]
  %s6 = inlined_call_operand.<no memory space> [shape: f32[1,1], index: 6, kind: input, shape index: {}]
  %s7 = inlined_call_operand.vmem [shape: f32[128,1], index: 7, kind: output, shape index: {}]
  %s8 = sld [smem:[#allocation0]]
  $region42: #{tpu_custom_call.1} parent=0
    _
  %s10 = ssub.s32 1, %s8
  %s11 = scalar_select 0, %s10, %s8
  %v12 = vstv %s6
  %13 = vst [vmem:[#allocation2] sm:$0x1] %v12
  $region1: #{tpu_custom_call.1} parent=0
    #allocation3 [shape = 'u8[262144]{0}', space=vmem, size = 0x40000, scoped, tag = 'input window, operand 3, single buffered']
    #allocation4 [shape = 's32[1]{0}', space=sflag, size = 0x4, scoped, tag = 'scoped memory for tpu_custom_call.1']
    %14 = vsyncpa [#allocation4], 0
    // Predicated region
    $region2: #{tpu_custom_call.1} parent=1 // pred_check
      _
    $region3: #{tpu_custom_call.1} parent=1 // pred_check_branch
      %16 = sbr.rel (0) target = $region5
    $region4: #{tpu_custom_call.1} parent=1 // pred_region
      _
    $region5: #{tpu_custom_call.1} parent=1 // pred_fallthru
      _
    // Predicated region
    $region6: #{tpu_custom_call.1} parent=1 // pred_check
      _
    $region7: #{tpu_custom_call.1} parent=1 // pred_check_branch
      %18 = sbr.rel (0) target = $region9
    $region8: #{tpu_custom_call.1} parent=1 // pred_region
      _
    $region9: #{tpu_custom_call.1} parent=1 // pred_fallthru
      _
    // Predicated region
    $region10: #{tpu_custom_call.1} parent=1 // pred_check
      _
    $region11: #{tpu_custom_call.1} parent=1 // pred_check_branch
      %20 = sbr.rel (0) target = $region13
    $region12: #{tpu_custom_call.1} parent=1 // pred_region
      _
    $region13: #{tpu_custom_call.1} parent=1 // pred_fallthru
      _
    // Predicated region
    $region14: #{tpu_custom_call.1} parent=1 // pred_check
      _
    $region15: #{tpu_custom_call.1} parent=1 // pred_check_branch
      %22 = sbr.rel (0) target = $region17
    $region16: #{tpu_custom_call.1} parent=1 // pred_region
      %24 = vsyncadd [#allocation4], 0
      %s25 = sshll.u32 %s3, 4
      %s26 = int_to_ptr.hbm [resolvable:$true] %s25
      %s27 = sshll.u32 [#allocation3], 4
      %s28 = int_to_ptr.vmem [resolvable:$true] %s27
      %33 = dma.hbm_to_vmem [thread:$0]  %s26, 8192, %s28, [#allocation4], 256, 256, 16
    $region17: #{tpu_custom_call.1} parent=1 // pred_fallthru
      _
    // Predicated region
    $region18: #{tpu_custom_call.1} parent=1 // pred_check
      _
    $region19: #{tpu_custom_call.1} parent=1 // pred_check_branch
      %35 = sbr.rel (0) target = $region21
    $region20: #{tpu_custom_call.1} parent=1 // pred_region
      _
    $region21: #{tpu_custom_call.1} parent=1 // pred_fallthru
      _
    // Predicated region
    $region22: #{tpu_custom_call.1} parent=1 // pred_check
      _
    $region23: #{tpu_custom_call.1} parent=1 // pred_check_branch
      %37 = sbr.rel (0) target = $region25
    $region24: #{tpu_custom_call.1} parent=1 // pred_region
      _
    $region25: #{tpu_custom_call.1} parent=1 // pred_fallthru
      _
    // Predicated region
    $region26: #{tpu_custom_call.1} parent=1 // pred_check
      _
    $region27: #{tpu_custom_call.1} parent=1 // pred_check_branch
      %39 = sbr.rel (0) target = $region29
    $region28: #{tpu_custom_call.1} parent=1 // pred_region
      _
    $region29: #{tpu_custom_call.1} parent=1 // pred_fallthru
      _
    // Predicated region
    $region30: #{tpu_custom_call.1} parent=1 // pred_check
      _
    $region31: #{tpu_custom_call.1} parent=1 // pred_check_branch
      %41 = sbr.rel (0) target = $region33
    $region32: #{tpu_custom_call.1} parent=1 // pred_region
      %43 = dma.done [#allocation4], 8192
    $region33: #{tpu_custom_call.1} parent=1 // pred_fallthru
      _
    %v44 = vld [vmem:[%s0] sm:$0xff]
    %v45 = vld [vmem:[%s0 + $0x8] sm:$0xff]
    %v46 = vld [vmem:[%s0 + $0x10] sm:$0xff]
    %v47 = vld [vmem:[%s0 + $0x18] sm:$0xff]
    %v48 = vld [vmem:[%s0 + $0x20] sm:$0xff]
    %v49 = vld [vmem:[%s0 + $0x28] sm:$0xff]
    %v50 = vld [vmem:[%s0 + $0x30] sm:$0xff]
    %v51 = vld [vmem:[%s0 + $0x38] sm:$0xff]
    %v52 = vld [vmem:[%s0 + $0x40] sm:$0xff]
    %v53 = vld [vmem:[%s0 + $0x48] sm:$0xff]
    %v54 = vld [vmem:[%s0 + $0x50] sm:$0xff]
    %v55 = vld [vmem:[%s0 + $0x58] sm:$0xff]
    %v56 = vld [vmem:[%s0 + $0x60] sm:$0xff]
    %v57 = vld [vmem:[%s0 + $0x68] sm:$0xff]
    %v58 = vld [vmem:[%s0 + $0x70] sm:$0xff]
    %v59 = vld [vmem:[%s0 + $0x78] sm:$0xff]
    %v60 = vld [vmem:[%s1] sm:$0xff]
    %v61 = vld [vmem:[%s1 + $0x8] sm:$0xff]
    %v62 = vld [vmem:[%s1 + $0x10] sm:$0xff]
    %v63 = vld [vmem:[%s1 + $0x18] sm:$0xff]
    %v64 = vld [vmem:[%s1 + $0x20] sm:$0xff]
    %v65 = vld [vmem:[%s1 + $0x28] sm:$0xff]
    %v66 = vld [vmem:[%s1 + $0x30] sm:$0xff]
    %v67 = vld [vmem:[%s1 + $0x38] sm:$0xff]
    %v68 = vld [vmem:[%s2] sm:$0x3]
    %v70 = vperm.slane %v68, 0
    %v71 = vperm.slane %v68, 1
    %vm74 = vcmask 261120
    %v76 = vsel %vm74, %v44, 0
    %v79 = vsel %vm74, %v45, 0
    %v82 = vsel %vm74, %v46, 0
    %v85 = vsel %vm74, %v47, 0
    %v88 = vsel %vm74, %v48, 0
    %v91 = vsel %vm74, %v49, 0
    %v94 = vsel %vm74, %v50, 0
    %v97 = vsel %vm74, %v51, 0
    %v100 = vsel %vm74, %v52, 0
    %v103 = vsel %vm74, %v53, 0
    %v106 = vsel %vm74, %v54, 0
    %v109 = vsel %vm74, %v55, 0
    %v112 = vsel %vm74, %v56, 0
    %v115 = vsel %vm74, %v57, 0
    %v118 = vsel %vm74, %v58, 0
    %v121 = vsel %vm74, %v59, 0
    %123 = vmatpush.msra.mxu0 0.0
    %124 = vmatpush.msra.mxu0 0.0
    %125 = vmatpush.msra.mxu0 0.0
    %126 = vmatpush.msra.mxu0 0.0
    %127 = vmatpush.msra.mxu0 0.0
    %128 = vmatpush.msra.mxu0 0.0
    %129 = vmatpush.msra.mxu0 0.0
    %130 = vmatpush.msra.mxu0 0.0
    %131 = vmatpush.msra.mxu0 0.0
    %132 = vmatpush.msra.mxu0 0.0
    %133 = vmatpush.msra.mxu0 0.0
    %134 = vmatpush.msra.mxu0 0.0
    %135 = vmatpush.msra.mxu0 %v66
    %136 = vmatpush.msra.mxu0 %v64
    %137 = vmatpush.msra.mxu0 %v62
    %138 = vmatpush.msra.mxu0 %v60
    %139 = vmatmul.f32.gmra.mxu0 %v76
    %v140 = vpop.f32.mrf.mxu0
    %v141 = vadd.f32 %v70, %v140
    %142 = vmatmul.f32.gmra.mxu0 %v79
    %v143 = vpop.f32.mrf.mxu0
    %v144 = vadd.f32 %v70, %v143
    %145 = vmatmul.f32.gmra.mxu0 %v82
    %v146 = vpop.f32.mrf.mxu0
    %v147 = vadd.f32 %v70, %v146
    %148 = vmatmul.f32.gmra.mxu0 %v85
    %v149 = vpop.f32.mrf.mxu0
    %v150 = vadd.f32 %v70, %v149
    %151 = vmatmul.f32.gmra.mxu0 %v88
    %v152 = vpop.f32.mrf.mxu0
    %v153 = vadd.f32 %v70, %v152
    %154 = vmatmul.f32.gmra.mxu0 %v91
    %v155 = vpop.f32.mrf.mxu0
    %v156 = vadd.f32 %v70, %v155
    %157 = vmatmul.f32.gmra.mxu0 %v94
    %v158 = vpop.f32.mrf.mxu0
    %v159 = vadd.f32 %v70, %v158
    %160 = vmatmul.f32.gmra.mxu0 %v97
    %v161 = vpop.f32.mrf.mxu0
    %v162 = vadd.f32 %v70, %v161
    %163 = vmatmul.f32.gmra.mxu0 %v100
    %v164 = vpop.f32.mrf.mxu0
    %v165 = vadd.f32 %v70, %v164
    %166 = vmatmul.f32.gmra.mxu0 %v103
    %v167 = vpop.f32.mrf.mxu0
    %v168 = vadd.f32 %v70, %v167
    %169 = vmatmul.f32.gmra.mxu0 %v106
    %v170 = vpop.f32.mrf.mxu0
    %v171 = vadd.f32 %v70, %v170
    %172 = vmatmul.f32.gmra.mxu0 %v109
    %v173 = vpop.f32.mrf.mxu0
    %v174 = vadd.f32 %v70, %v173
    %175 = vmatmul.f32.gmra.mxu0 %v112
    %v176 = vpop.f32.mrf.mxu0
    %v177 = vadd.f32 %v70, %v176
    %178 = vmatmul.f32.gmra.mxu0 %v115
    %v179 = vpop.f32.mrf.mxu0
    %v180 = vadd.f32 %v70, %v179
    %181 = vmatmul.f32.gmra.mxu0 %v118
    %v182 = vpop.f32.mrf.mxu0
    %v183 = vadd.f32 %v70, %v182
    %184 = vmatmul.f32.gmra.mxu0 %v121
    %v185 = vpop.f32.mrf.mxu0
    %v186 = vadd.f32 %v70, %v185
    %187 = vdwg.mxu0
    %188 = vmatpush.msra.mxu0 0.0
    %189 = vmatpush.msra.mxu0 0.0
    %190 = vmatpush.msra.mxu0 0.0
    %191 = vmatpush.msra.mxu0 0.0
    %192 = vmatpush.msra.mxu0 0.0
    %193 = vmatpush.msra.mxu0 0.0
    %194 = vmatpush.msra.mxu0 0.0
    %195 = vmatpush.msra.mxu0 0.0
    %196 = vmatpush.msra.mxu0 0.0
    %197 = vmatpush.msra.mxu0 0.0
    %198 = vmatpush.msra.mxu0 0.0
    %199 = vmatpush.msra.mxu0 0.0
    %200 = vmatpush.msra.mxu0 %v67
    %201 = vmatpush.msra.mxu0 %v65
    %202 = vmatpush.msra.mxu0 %v63
    %203 = vmatpush.msra.mxu0 %v61
    %204 = vmatmul.f32.gmra.mxu0 %v76
    %v205 = vpop.f32.mrf.mxu0
    %v206 = vadd.f32 %v71, %v205
    %207 = vmatmul.f32.gmra.mxu0 %v79
    %v208 = vpop.f32.mrf.mxu0
    %v209 = vadd.f32 %v71, %v208
    %210 = vmatmul.f32.gmra.mxu0 %v82
    %v211 = vpop.f32.mrf.mxu0
    %v212 = vadd.f32 %v71, %v211
    %213 = vmatmul.f32.gmra.mxu0 %v85
    %v214 = vpop.f32.mrf.mxu0
    %v215 = vadd.f32 %v71, %v214
    %216 = vmatmul.f32.gmra.mxu0 %v88
    %v217 = vpop.f32.mrf.mxu0
    %v218 = vadd.f32 %v71, %v217
    %219 = vmatmul.f32.gmra.mxu0 %v91
    %v220 = vpop.f32.mrf.mxu0
    %v221 = vadd.f32 %v71, %v220
    %222 = vmatmul.f32.gmra.mxu0 %v94
    %v223 = vpop.f32.mrf.mxu0
    %v224 = vadd.f32 %v71, %v223
    %225 = vmatmul.f32.gmra.mxu0 %v97
    %v226 = vpop.f32.mrf.mxu0
    %v227 = vadd.f32 %v71, %v226
    %228 = vmatmul.f32.gmra.mxu0 %v100
    %v229 = vpop.f32.mrf.mxu0
    %v230 = vadd.f32 %v71, %v229
    %231 = vmatmul.f32.gmra.mxu0 %v103
    %v232 = vpop.f32.mrf.mxu0
    %v233 = vadd.f32 %v71, %v232
    %234 = vmatmul.f32.gmra.mxu0 %v106
    %v235 = vpop.f32.mrf.mxu0
    %v236 = vadd.f32 %v71, %v235
    %237 = vmatmul.f32.gmra.mxu0 %v109
    %v238 = vpop.f32.mrf.mxu0
    %v239 = vadd.f32 %v71, %v238
    %240 = vmatmul.f32.gmra.mxu0 %v112
    %v241 = vpop.f32.mrf.mxu0
    %v242 = vadd.f32 %v71, %v241
    %243 = vmatmul.f32.gmra.mxu0 %v115
    %v244 = vpop.f32.mrf.mxu0
    %v245 = vadd.f32 %v71, %v244
    %246 = vmatmul.f32.gmra.mxu0 %v118
    %v247 = vpop.f32.mrf.mxu0
    %v248 = vadd.f32 %v71, %v247
    %249 = vmatmul.f32.gmra.mxu0 %v121
    %v250 = vpop.f32.mrf.mxu0
    %v251 = vadd.f32 %v71, %v250
    %252 = vdwg.mxu0
    %v253 = vmax.f32 %v141, 0.0
    %v254 = vmax.f32 %v206, 0.0
    %v255 = vmax.f32 %v144, 0.0
    %v256 = vmax.f32 %v209, 0.0
    %v257 = vmax.f32 %v147, 0.0
    %v258 = vmax.f32 %v212, 0.0
    %v259 = vmax.f32 %v150, 0.0
    %v260 = vmax.f32 %v215, 0.0
    %v261 = vmax.f32 %v153, 0.0
    %v262 = vmax.f32 %v218, 0.0
    %v263 = vmax.f32 %v156, 0.0
    %v264 = vmax.f32 %v221, 0.0
    %v265 = vmax.f32 %v159, 0.0
    %v266 = vmax.f32 %v224, 0.0
    %v267 = vmax.f32 %v162, 0.0
    %v268 = vmax.f32 %v227, 0.0
    %v269 = vmax.f32 %v165, 0.0
    %v270 = vmax.f32 %v230, 0.0
    %v271 = vmax.f32 %v168, 0.0
    %v272 = vmax.f32 %v233, 0.0
    %v273 = vmax.f32 %v171, 0.0
    %v274 = vmax.f32 %v236, 0.0
    %v275 = vmax.f32 %v174, 0.0
    %v276 = vmax.f32 %v239, 0.0
    %v277 = vmax.f32 %v177, 0.0
    %v278 = vmax.f32 %v242, 0.0
    %v279 = vmax.f32 %v180, 0.0
    %v280 = vmax.f32 %v245, 0.0
    %v281 = vmax.f32 %v183, 0.0
    %v282 = vmax.f32 %v248, 0.0
    %v283 = vmax.f32 %v186, 0.0
    %v284 = vmax.f32 %v251, 0.0
    %v285 = vld [vmem:[#allocation3] sm:$0xff]
    %v286 = vld [vmem:[#allocation3 + $0x8] sm:$0xff]
    %v287 = vld [vmem:[#allocation3 + $0x10] sm:$0xff]
    %v288 = vld [vmem:[#allocation3 + $0x18] sm:$0xff]
    %v289 = vld [vmem:[#allocation3 + $0x20] sm:$0xff]
    %v290 = vld [vmem:[#allocation3 + $0x28] sm:$0xff]
    %v291 = vld [vmem:[#allocation3 + $0x30] sm:$0xff]
    %v292 = vld [vmem:[#allocation3 + $0x38] sm:$0xff]
    %v293 = vld [vmem:[#allocation3 + $0x40] sm:$0xff]
    %v294 = vld [vmem:[#allocation3 + $0x48] sm:$0xff]
    %v295 = vld [vmem:[#allocation3 + $0x50] sm:$0xff]
    %v296 = vld [vmem:[#allocation3 + $0x58] sm:$0xff]
    %v297 = vld [vmem:[#allocation3 + $0x60] sm:$0xff]
    %v298 = vld [vmem:[#allocation3 + $0x68] sm:$0xff]
    %v299 = vld [vmem:[#allocation3 + $0x70] sm:$0xff]
    %v300 = vld [vmem:[#allocation3 + $0x78] sm:$0xff]
    %v301 = vld [vmem:[#allocation3 + $0x80] sm:$0xff]
    %v302 = vld [vmem:[#allocation3 + $0x88] sm:$0xff]
    %v303 = vld [vmem:[#allocation3 + $0x90] sm:$0xff]
    %v304 = vld [vmem:[#allocation3 + $0x98] sm:$0xff]
    %v305 = vld [vmem:[#allocation3 + $0xa0] sm:$0xff]
    %v306 = vld [vmem:[#allocation3 + $0xa8] sm:$0xff]
    %v307 = vld [vmem:[#allocation3 + $0xb0] sm:$0xff]
    %v308 = vld [vmem:[#allocation3 + $0xb8] sm:$0xff]
    %v309 = vld [vmem:[#allocation3 + $0xc0] sm:$0xff]
    %v310 = vld [vmem:[#allocation3 + $0xc8] sm:$0xff]
    %v311 = vld [vmem:[#allocation3 + $0xd0] sm:$0xff]
    %v312 = vld [vmem:[#allocation3 + $0xd8] sm:$0xff]
    %v313 = vld [vmem:[#allocation3 + $0xe0] sm:$0xff]
    %v314 = vld [vmem:[#allocation3 + $0xe8] sm:$0xff]
    %v315 = vld [vmem:[#allocation3 + $0xf0] sm:$0xff]
    %v316 = vld [vmem:[#allocation3 + $0xf8] sm:$0xff]
    %v317 = vld [vmem:[#allocation3 + $0x100] sm:$0xff]
    %v318 = vld [vmem:[#allocation3 + $0x108] sm:$0xff]
    %v319 = vld [vmem:[#allocation3 + $0x110] sm:$0xff]
    %v320 = vld [vmem:[#allocation3 + $0x118] sm:$0xff]
    %v321 = vld [vmem:[#allocation3 + $0x120] sm:$0xff]
    %v322 = vld [vmem:[#allocation3 + $0x128] sm:$0xff]
    %v323 = vld [vmem:[#allocation3 + $0x130] sm:$0xff]
    %v324 = vld [vmem:[#allocation3 + $0x138] sm:$0xff]
    %v325 = vld [vmem:[#allocation3 + $0x140] sm:$0xff]
    %v326 = vld [vmem:[#allocation3 + $0x148] sm:$0xff]
    %v327 = vld [vmem:[#allocation3 + $0x150] sm:$0xff]
    %v328 = vld [vmem:[#allocation3 + $0x158] sm:$0xff]
    %v329 = vld [vmem:[#allocation3 + $0x160] sm:$0xff]
    %v330 = vld [vmem:[#allocation3 + $0x168] sm:$0xff]
    %v331 = vld [vmem:[#allocation3 + $0x170] sm:$0xff]
    %v332 = vld [vmem:[#allocation3 + $0x178] sm:$0xff]
    %v333 = vld [vmem:[#allocation3 + $0x180] sm:$0xff]
    %v334 = vld [vmem:[#allocation3 + $0x188] sm:$0xff]
    %v335 = vld [vmem:[#allocation3 + $0x190] sm:$0xff]
    %v336 = vld [vmem:[#allocation3 + $0x198] sm:$0xff]
    %v337 = vld [vmem:[#allocation3 + $0x1a0] sm:$0xff]
    %v338 = vld [vmem:[#allocation3 + $0x1a8] sm:$0xff]
    %v339 = vld [vmem:[#allocation3 + $0x1b0] sm:$0xff]
    %v340 = vld [vmem:[#allocation3 + $0x1b8] sm:$0xff]
    %v341 = vld [vmem:[#allocation3 + $0x1c0] sm:$0xff]
    %v342 = vld [vmem:[#allocation3 + $0x1c8] sm:$0xff]
    %v343 = vld [vmem:[#allocation3 + $0x1d0] sm:$0xff]
    %v344 = vld [vmem:[#allocation3 + $0x1d8] sm:$0xff]
    %v345 = vld [vmem:[#allocation3 + $0x1e0] sm:$0xff]
    %v346 = vld [vmem:[#allocation3 + $0x1e8] sm:$0xff]
    %v347 = vld [vmem:[#allocation3 + $0x1f0] sm:$0xff]
    %v348 = vld [vmem:[#allocation3 + $0x1f8] sm:$0xff]
    %v349 = vld [vmem:[%s4] sm:$0x3]
    %v351 = vperm.slane %v349, 0
    %v352 = vperm.slane %v349, 1
    %355 = vmatpush.msra.mxu0 %v315
    %356 = vmatpush.msra.mxu0 %v313
    %357 = vmatpush.msra.mxu0 %v311
    %358 = vmatpush.msra.mxu0 %v309
    %359 = vmatpush.msra.mxu0 %v307
    %360 = vmatpush.msra.mxu0 %v305
    %361 = vmatpush.msra.mxu0 %v303
    %362 = vmatpush.msra.mxu0 %v301
    %363 = vmatpush.msra.mxu0 %v299
    %364 = vmatpush.msra.mxu0 %v297
    %365 = vmatpush.msra.mxu0 %v295
    %366 = vmatpush.msra.mxu0 %v293
    %367 = vmatpush.msra.mxu0 %v291
    %368 = vmatpush.msra.mxu0 %v289
    %369 = vmatpush.msra.mxu0 %v287
    %370 = vmatpush.msra.mxu0 %v285
    %371 = vmatmul.f32.gmra.mxu0 %v253
    %v372 = vpop.f32.mrf.mxu0
    %v373 = vadd.f32 %v351, %v372
    %374 = vmatmul.f32.gmra.mxu0 %v255
    %v375 = vpop.f32.mrf.mxu0
    %v376 = vadd.f32 %v351, %v375
    %377 = vmatmul.f32.gmra.mxu0 %v257
    %v378 = vpop.f32.mrf.mxu0
    %v379 = vadd.f32 %v351, %v378
    %380 = vmatmul.f32.gmra.mxu0 %v259
    %v381 = vpop.f32.mrf.mxu0
    %v382 = vadd.f32 %v351, %v381
    %383 = vmatmul.f32.gmra.mxu0 %v261
    %v384 = vpop.f32.mrf.mxu0
    %v385 = vadd.f32 %v351, %v384
    %386 = vmatmul.f32.gmra.mxu0 %v263
    %v387 = vpop.f32.mrf.mxu0
    %v388 = vadd.f32 %v351, %v387
    %389 = vmatmul.f32.gmra.mxu0 %v265
    %v390 = vpop.f32.mrf.mxu0
    %v391 = vadd.f32 %v351, %v390
    %392 = vmatmul.f32.gmra.mxu0 %v267
    %v393 = vpop.f32.mrf.mxu0
    %v394 = vadd.f32 %v351, %v393
    %395 = vmatmul.f32.gmra.mxu0 %v269
    %v396 = vpop.f32.mrf.mxu0
    %v397 = vadd.f32 %v351, %v396
    %398 = vmatmul.f32.gmra.mxu0 %v271
    %v399 = vpop.f32.mrf.mxu0
    %v400 = vadd.f32 %v351, %v399
    %401 = vmatmul.f32.gmra.mxu0 %v273
    %v402 = vpop.f32.mrf.mxu0
    %v403 = vadd.f32 %v351, %v402
    %404 = vmatmul.f32.gmra.mxu0 %v275
    %v405 = vpop.f32.mrf.mxu0
    %v406 = vadd.f32 %v351, %v405
    %407 = vmatmul.f32.gmra.mxu0 %v277
    %v408 = vpop.f32.mrf.mxu0
    %v409 = vadd.f32 %v351, %v408
    %410 = vmatmul.f32.gmra.mxu0 %v279
    %v411 = vpop.f32.mrf.mxu0
    %v412 = vadd.f32 %v351, %v411
    %413 = vmatmul.f32.gmra.mxu0 %v281
    %v414 = vpop.f32.mrf.mxu0
    %v415 = vadd.f32 %v351, %v414
    %416 = vmatmul.f32.gmra.mxu0 %v283
    %v417 = vpop.f32.mrf.mxu0
    %v418 = vadd.f32 %v351, %v417
    %419 = vdwg.mxu0
    %420 = vmatpush.msra.mxu0 %v347
    %421 = vmatpush.msra.mxu0 %v345
    %422 = vmatpush.msra.mxu0 %v343
    %423 = vmatpush.msra.mxu0 %v341
    %424 = vmatpush.msra.mxu0 %v339
    %425 = vmatpush.msra.mxu0 %v337
    %426 = vmatpush.msra.mxu0 %v335
    %427 = vmatpush.msra.mxu0 %v333
    %428 = vmatpush.msra.mxu0 %v331
    %429 = vmatpush.msra.mxu0 %v329
    %430 = vmatpush.msra.mxu0 %v327
    %431 = vmatpush.msra.mxu0 %v325
    %432 = vmatpush.msra.mxu0 %v323
    %433 = vmatpush.msra.mxu0 %v321
    %434 = vmatpush.msra.mxu0 %v319
    %435 = vmatpush.msra.mxu0 %v317
    %436 = vmatmul.f32.gmra.mxu0 %v254
    %v437 = vpop.f32.mrf.mxu0
    %v438 = vadd.f32 %v373, %v437
    %439 = vmatmul.f32.gmra.mxu0 %v256
    %v440 = vpop.f32.mrf.mxu0
    %v441 = vadd.f32 %v376, %v440
    %442 = vmatmul.f32.gmra.mxu0 %v258
    %v443 = vpop.f32.mrf.mxu0
    %v444 = vadd.f32 %v379, %v443
    %445 = vmatmul.f32.gmra.mxu0 %v260
    %v446 = vpop.f32.mrf.mxu0
    %v447 = vadd.f32 %v382, %v446
    %448 = vmatmul.f32.gmra.mxu0 %v262
    %v449 = vpop.f32.mrf.mxu0
    %v450 = vadd.f32 %v385, %v449
    %451 = vmatmul.f32.gmra.mxu0 %v264
    %v452 = vpop.f32.mrf.mxu0
    %v453 = vadd.f32 %v388, %v452
    %454 = vmatmul.f32.gmra.mxu0 %v266
    %v455 = vpop.f32.mrf.mxu0
    %v456 = vadd.f32 %v391, %v455
    %457 = vmatmul.f32.gmra.mxu0 %v268
    %v458 = vpop.f32.mrf.mxu0
    %v459 = vadd.f32 %v394, %v458
    %460 = vmatmul.f32.gmra.mxu0 %v270
    %v461 = vpop.f32.mrf.mxu0
    %v462 = vadd.f32 %v397, %v461
    %463 = vmatmul.f32.gmra.mxu0 %v272
    %v464 = vpop.f32.mrf.mxu0
    %v465 = vadd.f32 %v400, %v464
    %466 = vmatmul.f32.gmra.mxu0 %v274
    %v467 = vpop.f32.mrf.mxu0
    %v468 = vadd.f32 %v403, %v467
    %469 = vmatmul.f32.gmra.mxu0 %v276
    %v470 = vpop.f32.mrf.mxu0
    %v471 = vadd.f32 %v406, %v470
    %472 = vmatmul.f32.gmra.mxu0 %v278
    %v473 = vpop.f32.mrf.mxu0
    %v474 = vadd.f32 %v409, %v473
    %475 = vmatmul.f32.gmra.mxu0 %v280
    %v476 = vpop.f32.mrf.mxu0
    %v477 = vadd.f32 %v412, %v476
    %478 = vmatmul.f32.gmra.mxu0 %v282
    %v479 = vpop.f32.mrf.mxu0
    %v480 = vadd.f32 %v415, %v479
    %481 = vmatmul.f32.gmra.mxu0 %v284
    %v482 = vpop.f32.mrf.mxu0
    %v483 = vadd.f32 %v418, %v482
    %484 = vdwg.mxu0
    %485 = vmatpush.msra.mxu0 %v316
    %486 = vmatpush.msra.mxu0 %v314
    %487 = vmatpush.msra.mxu0 %v312
    %488 = vmatpush.msra.mxu0 %v310
    %489 = vmatpush.msra.mxu0 %v308
    %490 = vmatpush.msra.mxu0 %v306
    %491 = vmatpush.msra.mxu0 %v304
    %492 = vmatpush.msra.mxu0 %v302
    %493 = vmatpush.msra.mxu0 %v300
    %494 = vmatpush.msra.mxu0 %v298
    %495 = vmatpush.msra.mxu0 %v296
    %496 = vmatpush.msra.mxu0 %v294
    %497 = vmatpush.msra.mxu0 %v292
    %498 = vmatpush.msra.mxu0 %v290
    %499 = vmatpush.msra.mxu0 %v288
    %500 = vmatpush.msra.mxu0 %v286
    %501 = vmatmul.f32.gmra.mxu0 %v253
    %v502 = vpop.f32.mrf.mxu0
    %v503 = vadd.f32 %v352, %v502
    %504 = vmatmul.f32.gmra.mxu0 %v255
    %v505 = vpop.f32.mrf.mxu0
    %v506 = vadd.f32 %v352, %v505
    %507 = vmatmul.f32.gmra.mxu0 %v257
    %v508 = vpop.f32.mrf.mxu0
    %v509 = vadd.f32 %v352, %v508
    %510 = vmatmul.f32.gmra.mxu0 %v259
    %v511 = vpop.f32.mrf.mxu0
    %v512 = vadd.f32 %v352, %v511
    %513 = vmatmul.f32.gmra.mxu0 %v261
    %v514 = vpop.f32.mrf.mxu0
    %v515 = vadd.f32 %v352, %v514
    %516 = vmatmul.f32.gmra.mxu0 %v263
    %v517 = vpop.f32.mrf.mxu0
    %v518 = vadd.f32 %v352, %v517
    %519 = vmatmul.f32.gmra.mxu0 %v265
    %v520 = vpop.f32.mrf.mxu0
    %v521 = vadd.f32 %v352, %v520
    %522 = vmatmul.f32.gmra.mxu0 %v267
    %v523 = vpop.f32.mrf.mxu0
    %v524 = vadd.f32 %v352, %v523
    %525 = vmatmul.f32.gmra.mxu0 %v269
    %v526 = vpop.f32.mrf.mxu0
    %v527 = vadd.f32 %v352, %v526
    %528 = vmatmul.f32.gmra.mxu0 %v271
    %v529 = vpop.f32.mrf.mxu0
    %v530 = vadd.f32 %v352, %v529
    %531 = vmatmul.f32.gmra.mxu0 %v273
    %v532 = vpop.f32.mrf.mxu0
    %v533 = vadd.f32 %v352, %v532
    %534 = vmatmul.f32.gmra.mxu0 %v275
    %v535 = vpop.f32.mrf.mxu0
    %v536 = vadd.f32 %v352, %v535
    %537 = vmatmul.f32.gmra.mxu0 %v277
    %v538 = vpop.f32.mrf.mxu0
    %v539 = vadd.f32 %v352, %v538
    %540 = vmatmul.f32.gmra.mxu0 %v279
    %v541 = vpop.f32.mrf.mxu0
    %v542 = vadd.f32 %v352, %v541
    %543 = vmatmul.f32.gmra.mxu0 %v281
    %v544 = vpop.f32.mrf.mxu0
    %v545 = vadd.f32 %v352, %v544
    %546 = vmatmul.f32.gmra.mxu0 %v283
    %v547 = vpop.f32.mrf.mxu0
    %v548 = vadd.f32 %v352, %v547
    %549 = vdwg.mxu0
    %550 = vmatpush.msra.mxu0 %v348
    %551 = vmatpush.msra.mxu0 %v346
    %552 = vmatpush.msra.mxu0 %v344
    %553 = vmatpush.msra.mxu0 %v342
    %554 = vmatpush.msra.mxu0 %v340
    %555 = vmatpush.msra.mxu0 %v338
    %556 = vmatpush.msra.mxu0 %v336
    %557 = vmatpush.msra.mxu0 %v334
    %558 = vmatpush.msra.mxu0 %v332
    %559 = vmatpush.msra.mxu0 %v330
    %560 = vmatpush.msra.mxu0 %v328
    %561 = vmatpush.msra.mxu0 %v326
    %562 = vmatpush.msra.mxu0 %v324
    %563 = vmatpush.msra.mxu0 %v322
    %564 = vmatpush.msra.mxu0 %v320
    %565 = vmatpush.msra.mxu0 %v318
    %566 = vmatmul.f32.gmra.mxu0 %v254
    %v567 = vpop.f32.mrf.mxu0
    %v568 = vadd.f32 %v503, %v567
    %569 = vmatmul.f32.gmra.mxu0 %v256
    %v570 = vpop.f32.mrf.mxu0
    %v571 = vadd.f32 %v506, %v570
    %572 = vmatmul.f32.gmra.mxu0 %v258
    %v573 = vpop.f32.mrf.mxu0
    %v574 = vadd.f32 %v509, %v573
    %575 = vmatmul.f32.gmra.mxu0 %v260
    %v576 = vpop.f32.mrf.mxu0
    %v577 = vadd.f32 %v512, %v576
    %578 = vmatmul.f32.gmra.mxu0 %v262
    %v579 = vpop.f32.mrf.mxu0
    %v580 = vadd.f32 %v515, %v579
    %581 = vmatmul.f32.gmra.mxu0 %v264
    %v582 = vpop.f32.mrf.mxu0
    %v583 = vadd.f32 %v518, %v582
    %584 = vmatmul.f32.gmra.mxu0 %v266
    %v585 = vpop.f32.mrf.mxu0
    %v586 = vadd.f32 %v521, %v585
    %587 = vmatmul.f32.gmra.mxu0 %v268
    %v588 = vpop.f32.mrf.mxu0
    %v589 = vadd.f32 %v524, %v588
    %590 = vmatmul.f32.gmra.mxu0 %v270
    %v591 = vpop.f32.mrf.mxu0
    %v592 = vadd.f32 %v527, %v591
    %593 = vmatmul.f32.gmra.mxu0 %v272
    %v594 = vpop.f32.mrf.mxu0
    %v595 = vadd.f32 %v530, %v594
    %596 = vmatmul.f32.gmra.mxu0 %v274
    %v597 = vpop.f32.mrf.mxu0
    %v598 = vadd.f32 %v533, %v597
    %599 = vmatmul.f32.gmra.mxu0 %v276
    %v600 = vpop.f32.mrf.mxu0
    %v601 = vadd.f32 %v536, %v600
    %602 = vmatmul.f32.gmra.mxu0 %v278
    %v603 = vpop.f32.mrf.mxu0
    %v604 = vadd.f32 %v539, %v603
    %605 = vmatmul.f32.gmra.mxu0 %v280
    %v606 = vpop.f32.mrf.mxu0
    %v607 = vadd.f32 %v542, %v606
    %608 = vmatmul.f32.gmra.mxu0 %v282
    %v609 = vpop.f32.mrf.mxu0
    %v610 = vadd.f32 %v545, %v609
    %611 = vmatmul.f32.gmra.mxu0 %v284
    %v612 = vpop.f32.mrf.mxu0
    %v613 = vadd.f32 %v548, %v612
    %614 = vdwg.mxu0
    %v615 = vmax.f32 %v438, 0.0
    %v616 = vmax.f32 %v568, 0.0
    %v617 = vmax.f32 %v441, 0.0
    %v618 = vmax.f32 %v571, 0.0
    %v619 = vmax.f32 %v444, 0.0
    %v620 = vmax.f32 %v574, 0.0
    %v621 = vmax.f32 %v447, 0.0
    %v622 = vmax.f32 %v577, 0.0
    %v623 = vmax.f32 %v450, 0.0
    %v624 = vmax.f32 %v580, 0.0
    %v625 = vmax.f32 %v453, 0.0
    %v626 = vmax.f32 %v583, 0.0
    %v627 = vmax.f32 %v456, 0.0
    %v628 = vmax.f32 %v586, 0.0
    %v629 = vmax.f32 %v459, 0.0
    %v630 = vmax.f32 %v589, 0.0
    %v631 = vmax.f32 %v462, 0.0
    %v632 = vmax.f32 %v592, 0.0
    %v633 = vmax.f32 %v465, 0.0
    %v634 = vmax.f32 %v595, 0.0
    %v635 = vmax.f32 %v468, 0.0
    %v636 = vmax.f32 %v598, 0.0
    %v637 = vmax.f32 %v471, 0.0
    %v638 = vmax.f32 %v601, 0.0
    %v639 = vmax.f32 %v474, 0.0
    %v640 = vmax.f32 %v604, 0.0
    %v641 = vmax.f32 %v477, 0.0
    %v642 = vmax.f32 %v607, 0.0
    %v643 = vmax.f32 %v480, 0.0
    %v644 = vmax.f32 %v610, 0.0
    %v645 = vmax.f32 %v483, 0.0
    %v646 = vmax.f32 %v613, 0.0
    %v647 = vld [vmem:[%s5] sm:$0x3]
    %v649 = vperm.slane %v647, 0
    %v650 = vperm.slane %v647, 1
    %v653 = vmul.f32 %v615, %v649
    %v654 = vmul.f32 %v616, %v650
    %v655 = vmul.f32 %v617, %v649
    %v656 = vmul.f32 %v618, %v650
    %v657 = vmul.f32 %v619, %v649
    %v658 = vmul.f32 %v620, %v650
    %v659 = vmul.f32 %v621, %v649
    %v660 = vmul.f32 %v622, %v650
    %v661 = vmul.f32 %v623, %v649
    %v662 = vmul.f32 %v624, %v650
    %v663 = vmul.f32 %v625, %v649
    %v664 = vmul.f32 %v626, %v650
    %v665 = vmul.f32 %v627, %v649
    %v666 = vmul.f32 %v628, %v650
    %v667 = vmul.f32 %v629, %v649
    %v668 = vmul.f32 %v630, %v650
    %v669 = vmul.f32 %v631, %v649
    %v670 = vmul.f32 %v632, %v650
    %v671 = vmul.f32 %v633, %v649
    %v672 = vmul.f32 %v634, %v650
    %v673 = vmul.f32 %v635, %v649
    %v674 = vmul.f32 %v636, %v650
    %v675 = vmul.f32 %v637, %v649
    %v676 = vmul.f32 %v638, %v650
    %v677 = vmul.f32 %v639, %v649
    %v678 = vmul.f32 %v640, %v650
    %v679 = vmul.f32 %v641, %v649
    %v680 = vmul.f32 %v642, %v650
    %v681 = vmul.f32 %v643, %v649
    %v682 = vmul.f32 %v644, %v650
    %v683 = vmul.f32 %v645, %v649
    %v684 = vmul.f32 %v646, %v650
    %v685 = vadd.f32 %v653, %v654
    %686 = vadd.xlane.f32.xlu0 %v685
    %v687 = vpop.xlane.xlu0 %686
    %v688 = vadd.f32 %v655, %v656
    %689 = vadd.xlane.f32.xlu0 %v688
    %v690 = vpop.xlane.xlu0 %689
    %v691 = vadd.f32 %v657, %v658
    %692 = vadd.xlane.f32.xlu0 %v691
    %v693 = vpop.xlane.xlu0 %692
    %v694 = vadd.f32 %v659, %v660
    %695 = vadd.xlane.f32.xlu0 %v694
    %v696 = vpop.xlane.xlu0 %695
    %v697 = vadd.f32 %v661, %v662
    %698 = vadd.xlane.f32.xlu0 %v697
    %v699 = vpop.xlane.xlu0 %698
    %v700 = vadd.f32 %v663, %v664
    %701 = vadd.xlane.f32.xlu0 %v700
    %v702 = vpop.xlane.xlu0 %701
    %v703 = vadd.f32 %v665, %v666
    %704 = vadd.xlane.f32.xlu0 %v703
    %v705 = vpop.xlane.xlu0 %704
    %v706 = vadd.f32 %v667, %v668
    %707 = vadd.xlane.f32.xlu0 %v706
    %v708 = vpop.xlane.xlu0 %707
    %v709 = vadd.f32 %v669, %v670
    %710 = vadd.xlane.f32.xlu0 %v709
    %v711 = vpop.xlane.xlu0 %710
    %v712 = vadd.f32 %v671, %v672
    %713 = vadd.xlane.f32.xlu0 %v712
    %v714 = vpop.xlane.xlu0 %713
    %v715 = vadd.f32 %v673, %v674
    %716 = vadd.xlane.f32.xlu0 %v715
    %v717 = vpop.xlane.xlu0 %716
    %v718 = vadd.f32 %v675, %v676
    %719 = vadd.xlane.f32.xlu0 %v718
    %v720 = vpop.xlane.xlu0 %719
    %v721 = vadd.f32 %v677, %v678
    %722 = vadd.xlane.f32.xlu0 %v721
    %v723 = vpop.xlane.xlu0 %722
    %v724 = vadd.f32 %v679, %v680
    %725 = vadd.xlane.f32.xlu0 %v724
    %v726 = vpop.xlane.xlu0 %725
    %v727 = vadd.f32 %v681, %v682
    %728 = vadd.xlane.f32.xlu0 %v727
    %v729 = vpop.xlane.xlu0 %728
    %v730 = vadd.f32 %v683, %v684
    %731 = vadd.xlane.f32.xlu0 %v730
    %v732 = vpop.xlane.xlu0 %731
    %v733 = vld [vmem:[#allocation2] sm:$0x1]
    %v735 = vperm.slane %v733, 0
    %v737 = vadd.f32 %v687, %v735
    %v738 = vadd.f32 %v690, %v735
    %v739 = vadd.f32 %v693, %v735
    %v740 = vadd.f32 %v696, %v735
    %v741 = vadd.f32 %v699, %v735
    %v742 = vadd.f32 %v702, %v735
    %v743 = vadd.f32 %v705, %v735
    %v744 = vadd.f32 %v708, %v735
    %v745 = vadd.f32 %v711, %v735
    %v746 = vadd.f32 %v714, %v735
    %v747 = vadd.f32 %v717, %v735
    %v748 = vadd.f32 %v720, %v735
    %v749 = vadd.f32 %v723, %v735
    %v750 = vadd.f32 %v726, %v735
    %v751 = vadd.f32 %v729, %v735
    %v752 = vadd.f32 %v732, %v735
    %vm753 = vcmask 7168
    %754 = vst.msk [vmem:[%s7] sm:$0xff] %vm753, %v737
    %755 = vst.msk [vmem:[%s7 + $0x8] sm:$0xff] %vm753, %v738
    %756 = vst.msk [vmem:[%s7 + $0x10] sm:$0xff] %vm753, %v739
    %757 = vst.msk [vmem:[%s7 + $0x18] sm:$0xff] %vm753, %v740
    %758 = vst.msk [vmem:[%s7 + $0x20] sm:$0xff] %vm753, %v741
    %759 = vst.msk [vmem:[%s7 + $0x28] sm:$0xff] %vm753, %v742
    %760 = vst.msk [vmem:[%s7 + $0x30] sm:$0xff] %vm753, %v743
    %761 = vst.msk [vmem:[%s7 + $0x38] sm:$0xff] %vm753, %v744
    %762 = vst.msk [vmem:[%s7 + $0x40] sm:$0xff] %vm753, %v745
    %763 = vst.msk [vmem:[%s7 + $0x48] sm:$0xff] %vm753, %v746
    %764 = vst.msk [vmem:[%s7 + $0x50] sm:$0xff] %vm753, %v747
    %765 = vst.msk [vmem:[%s7 + $0x58] sm:$0xff] %vm753, %v748
    %766 = vst.msk [vmem:[%s7 + $0x60] sm:$0xff] %vm753, %v749
    %767 = vst.msk [vmem:[%s7 + $0x68] sm:$0xff] %vm753, %v750
    %768 = vst.msk [vmem:[%s7 + $0x70] sm:$0xff] %vm753, %v751
    %769 = vst.msk [vmem:[%s7 + $0x78] sm:$0xff] %vm753, %v752
    // Predicated region
    $region34: #{tpu_custom_call.1} parent=1 // pred_check
      _
    $region35: #{tpu_custom_call.1} parent=1 // pred_check_branch
      %771 = sbr.rel (0) target = $region37
    $region36: #{tpu_custom_call.1} parent=1 // pred_region
      _
    $region37: #{tpu_custom_call.1} parent=1 // pred_fallthru
      _
    // Predicated region
    $region38: #{tpu_custom_call.1} parent=1 // pred_check
      _
    $region39: #{tpu_custom_call.1} parent=1 // pred_check_branch
      %773 = sbr.rel (0) target = $region41
    $region40: #{tpu_custom_call.1} parent=1 // pred_region
      _
    $region41: #{tpu_custom_call.1} parent=1 // pred_fallthru
      _
    %774 = vsyncpa [#allocation4], 1

</llo_original>
